<compile_context>
chip_gen: v5e
topology: v5e:2x2
jax: 0.10.0
libtpu: 0.0.40
codegen_flags: <defaults>
</compile_context>

<pallas_src>
import numpy as np
import jax
import jax.numpy as jnp
from jax.experimental import pallas as pl
from jax.experimental.pallas import tpu as pltpu


def _round_up(n, m):
    return ((n + m - 1) // m) * m


def _orthogonal(key, out_dim, in_dim, gain):
    """Deterministic orthogonal init (semantics of nn.init.orthogonal_), returns (out, in)."""
    rows, cols = out_dim, in_dim
    a = jax.random.normal(key, (rows, cols), dtype=jnp.float32)
    flat = a.T if rows < cols else a
    q, r = jnp.linalg.qr(flat)
    d = jnp.sign(jnp.diag(r))           # make the decomposition unique (PyTorch trick)
    q = q * d[None, :]
    if rows < cols:
        q = q.T
    return (gain * q).astype(jnp.float32)


def value_net_kernel(x_ref,
                     w1_ref, b1_ref,
                     w2_ref, b2_ref,
                     w3_ref, b3_ref,
                     w4_ref, b4_ref,
                     o_ref):
    """Whole 4-layer MLP on one (features, batch_tile) tile.

    Activations are feature-major: (features, batch_tile), batch on lanes.
    Hidden layers run on the MXU with f32 accumulation; the final H/2 -> 1
    projection is a VPU multiply + sublane reduce so the output row is
    produced lane-dense.
    """
    w_dtype = w1_ref.dtype
    x = x_ref[...].astype(w_dtype)                                        # (D_pad, T)
    h1 = jnp.maximum(
        jnp.dot(w1_ref[...], x, preferred_element_type=jnp.float32)
        + b1_ref[...], 0.0)                                               # (H, T) f32
    h2 = jnp.maximum(
        jnp.dot(w2_ref[...], h1.astype(w_dtype),
                preferred_element_type=jnp.float32) + b2_ref[...], 0.0)   # (H, T) f32
    h3 = jnp.maximum(
        jnp.dot(w3_ref[...], h2.astype(w_dtype),
                preferred_element_type=jnp.float32) + b3_ref[...], 0.0)   # (H2, T) f32
    # Final layer: value[b] = sum_f W4[f] * h3[f, b] + b4  -> (1, T), lane-dense.
    o_ref[...] = (jnp.sum(h3 * w4_ref[...].astype(jnp.float32),
                          axis=0, keepdims=True) + b4_ref[...])


def value_network_forward(x, params, *, batch_tile=1024):
    """x: (B, D) f32. params in PyTorch (out, in) orientation (w1 zero-padded along its
    input dim to a multiple of 8). Returns (B, 1) f32, matching the nn.Module."""
    B, D = x.shape
    D_pad = params["w1"].shape[1]
    assert D <= D_pad, "params were built for a smaller input_dim"

    # Lane-dense batch tiling: tile is a multiple of 128, batch zero-padded to it.
    tile = min(_round_up(batch_tile, 128), _round_up(B, 128))
    b_pad = _round_up(B, tile)
    grid = (b_pad // tile,)

    # Feature-major, zero-padded input: (D_pad, B_pad).
    xT = jnp.zeros((D_pad, b_pad), jnp.float32).at[:D, :B].set(x.T)

    def resident(arr):
        # Constant index_map -> parameter block stays resident in VMEM across grid steps.
        return pl.BlockSpec(arr.shape, lambda i: (0, 0))

    out = pl.pallas_call(
        value_net_kernel,
        out_shape=jax.ShapeDtypeStruct((1, b_pad), jnp.float32),
        grid=grid,
        in_specs=[
            pl.BlockSpec((D_pad, tile), lambda i: (0, i)),   # x tile, batch on lanes
            resident(params["w1"]), resident(params["b1"]),
            resident(params["w2"]), resident(params["b2"]),
            resident(params["w3"]), resident(params["b3"]),
            resident(params["w4"]), resident(params["b4"]),
        ],
        out_specs=pl.BlockSpec((1, tile), lambda i: (0, i)),  # lane-dense value row
        compiler_params=pltpu.CompilerParams(
            dimension_semantics=("parallel",)),
    )(xT,
      params["w1"], params["b1"],
      params["w2"], params["b2"],
      params["w3"], params["b3"],
      params["w4"], params["b4"])

    return out[0, :B].reshape(B, 1)


def make_params(key, input_dim, hidden_dim=128, param_dtype=jnp.float32):
    """Parameters matching ValueNetwork.__init__, stored in PyTorch (out, in) orientation.
    w1's input dim is zero-padded to a multiple of 8 (sublane alignment); biases stay f32.
    param_dtype=jnp.bfloat16 halves weight traffic on v6e/v7x (accumulation stays f32)."""
    gain = float(np.sqrt(2.0))
    k1, k2, k3, k4 = jax.random.split(key, 4)
    h = hidden_dim
    h2 = hidden_dim // 2
    d_pad = _round_up(input_dim, 8)

    w1 = _orthogonal(k1, h, input_dim, gain)                         # (H, D)
    w1 = jnp.zeros((h, d_pad), jnp.float32).at[:, :input_dim].set(w1)
    w2 = _orthogonal(k2, h, h, gain)                                 # (H, H)
    w3 = _orthogonal(k3, h2, h, gain)                                # (H2, H)
    w4 = _orthogonal(k4, 1, h2, gain).T                              # (H2, 1) column

    return {
        "w1": w1.astype(param_dtype), "b1": jnp.zeros((h, 1), jnp.float32),
        "w2": w2.astype(param_dtype), "b2": jnp.zeros((h, 1), jnp.float32),
        "w3": w3.astype(param_dtype), "b3": jnp.zeros((h2, 1), jnp.float32),
        "w4": w4.astype(param_dtype), "b4": jnp.zeros((1, 1), jnp.float32),
    }


def value_network_ref(x, params):
    """Pure-JAX reference of the PyTorch forward (batch-major) for correctness checks."""
    D = x.shape[1]
    w1 = params["w1"][:, :D].astype(jnp.float32)
    h = jnp.maximum(x @ w1.T + params["b1"][:, 0], 0.0)
    h = jnp.maximum(h @ params["w2"].astype(jnp.float32).T + params["b2"][:, 0], 0.0)
    h = jnp.maximum(h @ params["w3"].astype(jnp.float32).T + params["b3"][:, 0], 0.0)
    return h @ params["w4"].astype(jnp.float32) + params["b4"][0]


if __name__ == "__main__":
    key = jax.random.PRNGKey(0)
    k_params, k_x1, k_x2 = jax.random.split(key, 3)

    # Pendulum-v1 observation is 3-dim (cos theta, sin theta, theta_dot).
    input_dim, hidden_dim = 3, 128
    params = make_params(k_params, input_dim, hidden_dim)

    # Small batch: one 128-wide lane-dense tile, grid=(1,).
    x_small = jax.random.normal(k_x1, (8, input_dim), dtype=jnp.float32)
    out_small = jax.block_until_ready(value_network_forward(x_small, params))
    np.testing.assert_allclose(np.asarray(out_small),
                               np.asarray(value_network_ref(x_small, params)),
                               rtol=1e-4, atol=1e-5)
    assert out_small.shape == (8, 1)

    # Non-multiple batch: exercises zero-padding + multi-step "parallel" grid.
    x_big = jax.random.normal(k_x2, (300, input_dim), dtype=jnp.float32)
    out_big = jax.block_until_ready(
        value_network_forward(x_big, params, batch_tile=128))
    np.testing.assert_allclose(np.asarray(out_big),
                               np.asarray(value_network_ref(x_big, params)),
                               rtol=1e-4, atol=1e-5)
    assert out_big.shape == (300, 1)

    print("KERNEL_OK")
</pallas_src>

<mosaic_0001>
module attributes {stable_mosaic.version = 11 : i64} {
  func.func @value_net_kernel(%arg0: i32, %arg1: memref<8x128xf32, #tpu.memory_space<vmem>>, %arg2: memref<128x8xf32, #tpu.memory_space<vmem>>, %arg3: memref<128x1xf32, #tpu.memory_space<vmem>>, %arg4: memref<128x128xf32, #tpu.memory_space<vmem>>, %arg5: memref<128x1xf32, #tpu.memory_space<vmem>>, %arg6: memref<64x128xf32, #tpu.memory_space<vmem>>, %arg7: memref<64x1xf32, #tpu.memory_space<vmem>>, %arg8: memref<64x1xf32, #tpu.memory_space<vmem>>, %arg9: memref<1x1xf32, #tpu.memory_space<vmem>>, %arg10: memref<1x128xf32, #tpu.memory_space<vmem>>) attributes {dimension_semantics = [#tpu.dimension_semantics<parallel>], iteration_bounds = array<i64: 1>, scalar_prefetch = 0 : i64, scratch_operands = 0 : i64, tpu.core_type = #tpu.core_type<tc>, window_params = [{transform_indices = @transform_0, window_bounds = array<i64: 8, 128>}, {pipeline_mode = #tpu.pipeline_mode<synchronous>, transform_indices = @transform_1, window_bounds = array<i64: 128, 8>}, {pipeline_mode = #tpu.pipeline_mode<synchronous>, transform_indices = @transform_2, window_bounds = array<i64: 128, 1>}, {pipeline_mode = #tpu.pipeline_mode<synchronous>, transform_indices = @transform_3, window_bounds = array<i64: 128, 128>}, {pipeline_mode = #tpu.pipeline_mode<synchronous>, transform_indices = @transform_4, window_bounds = array<i64: 128, 1>}, {pipeline_mode = #tpu.pipeline_mode<synchronous>, transform_indices = @transform_5, window_bounds = array<i64: 64, 128>}, {pipeline_mode = #tpu.pipeline_mode<synchronous>, transform_indices = @transform_6, window_bounds = array<i64: 64, 1>}, {pipeline_mode = #tpu.pipeline_mode<synchronous>, transform_indices = @transform_7, window_bounds = array<i64: 64, 1>}, {pipeline_mode = #tpu.pipeline_mode<synchronous>, transform_indices = @transform_8, window_bounds = array<i64: 1, 1>}, {transform_indices = @transform_9, window_bounds = array<i64: 1, 128>}]} {
    %c0 = arith.constant 0 : index
    %c0_0 = arith.constant 0 : index
    %0 = vector.load %arg1[%c0, %c0_0] : memref<8x128xf32, #tpu.memory_space<vmem>>, vector<8x128xf32>
    %c0_1 = arith.constant 0 : index
    %c0_2 = arith.constant 0 : index
    %1 = vector.load %arg2[%c0_1, %c0_2] : memref<128x8xf32, #tpu.memory_space<vmem>>, vector<128x8xf32>
    %cst = arith.constant dense<0.000000e+00> : vector<128x128xf32>
    %2 = tpu.matmul %1, %0, %cst {dimension_numbers = #tpu.dot_dimension_numbers<[1], [0], [0], [1], [0, 0, 1, 1], [], []>} : vector<128x8xf32>, vector<8x128xf32>, vector<128x128xf32> -> vector<128x128xf32>
    %c0_3 = arith.constant 0 : index
    %c0_4 = arith.constant 0 : index
    %3 = vector.load %arg3[%c0_3, %c0_4] : memref<128x1xf32, #tpu.memory_space<vmem>>, vector<128x1xf32>
    %4 = vector.broadcast %3 : vector<128x1xf32> to vector<128x128xf32>
    %5 = arith.addf %2, %4 : vector<128x128xf32>
    %cst_5 = arith.constant 0.000000e+00 : f32
    %6 = vector.broadcast %cst_5 : f32 to vector<128x128xf32>
    %7 = arith.maximumf %5, %6 : vector<128x128xf32>
    %c0_6 = arith.constant 0 : index
    %c0_7 = arith.constant 0 : index
    %8 = vector.load %arg4[%c0_6, %c0_7] : memref<128x128xf32, #tpu.memory_space<vmem>>, vector<128x128xf32>
    %cst_8 = arith.constant dense<0.000000e+00> : vector<128x128xf32>
    %9 = tpu.matmul %8, %7, %cst_8 {dimension_numbers = #tpu.dot_dimension_numbers<[1], [0], [0], [1], [0, 0, 1, 1], [], []>} : vector<128x128xf32>, vector<128x128xf32>, vector<128x128xf32> -> vector<128x128xf32>
    %c0_9 = arith.constant 0 : index
    %c0_10 = arith.constant 0 : index
    %10 = vector.load %arg5[%c0_9, %c0_10] : memref<128x1xf32, #tpu.memory_space<vmem>>, vector<128x1xf32>
    %11 = vector.broadcast %10 : vector<128x1xf32> to vector<128x128xf32>
    %12 = arith.addf %9, %11 : vector<128x128xf32>
    %cst_11 = arith.constant 0.000000e+00 : f32
    %13 = vector.broadcast %cst_11 : f32 to vector<128x128xf32>
    %14 = arith.maximumf %12, %13 : vector<128x128xf32>
    %c0_12 = arith.constant 0 : index
    %c0_13 = arith.constant 0 : index
    %15 = vector.load %arg6[%c0_12, %c0_13] : memref<64x128xf32, #tpu.memory_space<vmem>>, vector<64x128xf32>
    %cst_14 = arith.constant dense<0.000000e+00> : vector<64x128xf32>
    %16 = tpu.matmul %15, %14, %cst_14 {dimension_numbers = #tpu.dot_dimension_numbers<[1], [0], [0], [1], [0, 0, 1, 1], [], []>} : vector<64x128xf32>, vector<128x128xf32>, vector<64x128xf32> -> vector<64x128xf32>
    %c0_15 = arith.constant 0 : index
    %c0_16 = arith.constant 0 : index
    %17 = vector.load %arg7[%c0_15, %c0_16] : memref<64x1xf32, #tpu.memory_space<vmem>>, vector<64x1xf32>
    %18 = vector.broadcast %17 : vector<64x1xf32> to vector<64x128xf32>
    %19 = arith.addf %16, %18 : vector<64x128xf32>
    %cst_17 = arith.constant 0.000000e+00 : f32
    %20 = vector.broadcast %cst_17 : f32 to vector<64x128xf32>
    %21 = arith.maximumf %19, %20 : vector<64x128xf32>
    %c0_18 = arith.constant 0 : index
    %c0_19 = arith.constant 0 : index
    %22 = vector.load %arg8[%c0_18, %c0_19] : memref<64x1xf32, #tpu.memory_space<vmem>>, vector<64x1xf32>
    %23 = vector.broadcast %22 : vector<64x1xf32> to vector<64x128xf32>
    %24 = arith.mulf %21, %23 : vector<64x128xf32>
    %cst_20 = arith.constant dense<0.000000e+00> : vector<128xf32>
    %25 = vector.multi_reduction <add>, %24, %cst_20 [0] : vector<64x128xf32> to vector<128xf32>
    %26 = vector.shape_cast %25 : vector<128xf32> to vector<1x128xf32>
    %c0_21 = arith.constant 0 : index
    %c0_22 = arith.constant 0 : index
    %27 = vector.load %arg9[%c0_21, %c0_22] : memref<1x1xf32, #tpu.memory_space<vmem>>, vector<1x1xf32>
    %28 = vector.broadcast %27 : vector<1x1xf32> to vector<1x128xf32>
    %29 = arith.addf %26, %28 : vector<1x128xf32>
    %c0_23 = arith.constant 0 : index
    %c0_24 = arith.constant 0 : index
    %30 = vector.load %arg10[%c0_23, %c0_24] : memref<1x128xf32, #tpu.memory_space<vmem>>, vector<1x128xf32>
    tpu.vector_store %arg10[%c0_23, %c0_24], %29 {strides = array<i32>} : memref<1x128xf32, #tpu.memory_space<vmem>>, vector<1x128xf32>,
    return
  }
  func.func @transform_0(%arg0: i32) -> (i32, i32) {
    %c0_i32 = arith.constant 0 : i32
    %c0_i32_0 = arith.constant 0 : i32
    return %c0_i32, %arg0 : i32, i32
  }
  func.func @transform_1(%arg0: i32) -> (i32, i32) {
    %c0_i32 = arith.constant 0 : i32
    %c0_i32_0 = arith.constant 0 : i32
    %c0_i32_1 = arith.constant 0 : i32
    return %c0_i32, %c0_i32_0 : i32, i32
  }
  func.func @transform_2(%arg0: i32) -> (i32, i32) {
    %c0_i32 = arith.constant 0 : i32
    %c0_i32_0 = arith.constant 0 : i32
    %c0_i32_1 = arith.constant 0 : i32
    return %c0_i32, %c0_i32_0 : i32, i32
  }
  func.func @transform_3(%arg0: i32) -> (i32, i32) {
    %c0_i32 = arith.constant 0 : i32
    %c0_i32_0 = arith.constant 0 : i32
    %c0_i32_1 = arith.constant 0 : i32
    return %c0_i32, %c0_i32_0 : i32, i32
  }
  func.func @transform_4(%arg0: i32) -> (i32, i32) {
    %c0_i32 = arith.constant 0 : i32
    %c0_i32_0 = arith.constant 0 : i32
    %c0_i32_1 = arith.constant 0 : i32
    return %c0_i32, %c0_i32_0 : i32, i32
  }
  func.func @transform_5(%arg0: i32) -> (i32, i32) {
    %c0_i32 = arith.constant 0 : i32
    %c0_i32_0 = arith.constant 0 : i32
    %c0_i32_1 = arith.constant 0 : i32
    return %c0_i32, %c0_i32_0 : i32, i32
  }
  func.func @transform_6(%arg0: i32) -> (i32, i32) {
    %c0_i32 = arith.constant 0 : i32
    %c0_i32_0 = arith.constant 0 : i32
    %c0_i32_1 = arith.constant 0 : i32
    return %c0_i32, %c0_i32_0 : i32, i32
  }
  func.func @transform_7(%arg0: i32) -> (i32, i32) {
    %c0_i32 = arith.constant 0 : i32
    %c0_i32_0 = arith.constant 0 : i32
    %c0_i32_1 = arith.constant 0 : i32
    return %c0_i32, %c0_i32_0 : i32, i32
  }
  func.func @transform_8(%arg0: i32) -> (i32, i32) {
    %c0_i32 = arith.constant 0 : i32
    %c0_i32_0 = arith.constant 0 : i32
    %c0_i32_1 = arith.constant 0 : i32
    return %c0_i32, %c0_i32_0 : i32, i32
  }
  func.func @transform_9(%arg0: i32) -> (i32, i32) {
    %c0_i32 = arith.constant 0 : i32
    %c0_i32_0 = arith.constant 0 : i32
    return %c0_i32, %arg0 : i32, i32
  }
}

</mosaic_0001>

<llo_original>
// kernel: tpu_custom_call.1
$region0: #{tpu_custom_call.1}
  #allocation0 [shape = 'u32[]', space=smem, size = 0x4, offset = 0x4, fixed_abs, tag = 'smem constant byte address 0x4 - core index']
  #allocation1 [shape = 'u32[72,128]{1,0:T(1,128)}', space=vmem, size = 0x9000, scoped, tag = 'internal scratch']
  #allocation2 [shape = 'f32[1,1]{1,0:T(1,128)S(1)}', space=vmem, size = 0x200, scoped, tag = 'scoped memory for tpu_custom_call.1']
  %s0 = inlined_call_operand.vmem [shape: f32[8,128], index: 0, kind: input, shape index: {}]
  %s1 = inlined_call_operand.vmem [shape: f32[128,8], index: 1, kind: input, shape index: {}]
  %s2 = inlined_call_operand.vmem [shape: f32[128,1], index: 2, kind: input, shape index: {}]
  %s3 = inlined_call_operand.vmem [shape: f32[128,128], index: 3, kind: input, shape index: {}]
  %s4 = inlined_call_operand.vmem [shape: f32[128,1], index: 4, kind: input, shape index: {}]
  %s5 = inlined_call_operand.vmem [shape: f32[64,128], index: 5, kind: input, shape index: {}]
  %s6 = inlined_call_operand.vmem [shape: f32[64,1], index: 6, kind: input, shape index: {}]
  %s7 = inlined_call_operand.vmem [shape: f32[64,1], index: 7, kind: input, shape index: {}]
  %s8 = inlined_call_operand.<no memory space> [shape: f32[1,1], index: 8, kind: input, shape index: {}]
  %s9 = inlined_call_operand.hbm [shape: f32[1,128], index: 9, kind: output, shape index: {}]
  %s10 = sld [smem:[#allocation0]]
  $region46: #{tpu_custom_call.1} parent=0
    _
  %s12 = ssub.s32 1, %s10
  %s13 = scalar_select 0, %s12, %s10
  %v14 = vstv %s8
  %15 = vst [vmem:[#allocation2] sm:$0x1] %v14
  $region1: #{tpu_custom_call.1} parent=0
    #allocation3 [shape = 'u8[512]{0}', space=vmem, size = 0x400, scoped, tag = 'output window, operand 0, single buffered']
    #allocation4 [shape = 's32[1]{0}', space=sflag, size = 0x4, scoped, tag = 'scoped memory for tpu_custom_call.1']
    %16 = vsyncpa [#allocation4], 0
    // Predicated region
    $region2: #{tpu_custom_call.1} parent=1 // pred_check
      _
    $region3: #{tpu_custom_call.1} parent=1 // pred_check_branch
      %18 = sbr.rel (0) target = $region5
    $region4: #{tpu_custom_call.1} parent=1 // pred_region
      _
    $region5: #{tpu_custom_call.1} parent=1 // pred_fallthru
      _
    // Predicated region
    $region6: #{tpu_custom_call.1} parent=1 // pred_check
      _
    $region7: #{tpu_custom_call.1} parent=1 // pred_check_branch
      %20 = sbr.rel (0) target = $region9
    $region8: #{tpu_custom_call.1} parent=1 // pred_region
      _
    $region9: #{tpu_custom_call.1} parent=1 // pred_fallthru
      _
    // Predicated region
    $region10: #{tpu_custom_call.1} parent=1 // pred_check
      _
    $region11: #{tpu_custom_call.1} parent=1 // pred_check_branch
      %22 = sbr.rel (0) target = $region13
    $region12: #{tpu_custom_call.1} parent=1 // pred_region
      _
    $region13: #{tpu_custom_call.1} parent=1 // pred_fallthru
      _
    // Predicated region
    $region14: #{tpu_custom_call.1} parent=1 // pred_check
      _
    $region15: #{tpu_custom_call.1} parent=1 // pred_check_branch
      %24 = sbr.rel (0) target = $region17
    $region16: #{tpu_custom_call.1} parent=1 // pred_region
      _
    $region17: #{tpu_custom_call.1} parent=1 // pred_fallthru
      _
    // Predicated region
    $region18: #{tpu_custom_call.1} parent=1 // pred_check
      _
    $region19: #{tpu_custom_call.1} parent=1 // pred_check_branch
      %26 = sbr.rel (0) target = $region21
    $region20: #{tpu_custom_call.1} parent=1 // pred_region
      _
    $region21: #{tpu_custom_call.1} parent=1 // pred_fallthru
      _
    // Predicated region
    $region22: #{tpu_custom_call.1} parent=1 // pred_check
      _
    $region23: #{tpu_custom_call.1} parent=1 // pred_check_branch
      %28 = sbr.rel (0) target = $region25
    $region24: #{tpu_custom_call.1} parent=1 // pred_region
      _
    $region25: #{tpu_custom_call.1} parent=1 // pred_fallthru
      _
    // Predicated region
    $region26: #{tpu_custom_call.1} parent=1 // pred_check
      _
    $region27: #{tpu_custom_call.1} parent=1 // pred_check_branch
      %30 = sbr.rel (0) target = $region29
    $region28: #{tpu_custom_call.1} parent=1 // pred_region
      _
    $region29: #{tpu_custom_call.1} parent=1 // pred_fallthru
      _
    // Predicated region
    $region30: #{tpu_custom_call.1} parent=1 // pred_check
      _
    $region31: #{tpu_custom_call.1} parent=1 // pred_check_branch
      %32 = sbr.rel (0) target = $region33
    $region32: #{tpu_custom_call.1} parent=1 // pred_region
      _
    $region33: #{tpu_custom_call.1} parent=1 // pred_fallthru
      _
    // Predicated region
    $region34: #{tpu_custom_call.1} parent=1 // pred_check
      _
    $region35: #{tpu_custom_call.1} parent=1 // pred_check_branch
      %34 = sbr.rel (0) target = $region37
    $region36: #{tpu_custom_call.1} parent=1 // pred_region
      _
    $region37: #{tpu_custom_call.1} parent=1 // pred_fallthru
      _
    %v35 = vld [vmem:[%s0] sm:$0xff]
    %v36 = vld [vmem:[%s1] sm:$0xff]
    %v37 = vld [vmem:[%s1 + $0x8] sm:$0xff]
    %v38 = vld [vmem:[%s1 + $0x10] sm:$0xff]
    %v39 = vld [vmem:[%s1 + $0x18] sm:$0xff]
    %v40 = vld [vmem:[%s1 + $0x20] sm:$0xff]
    %v41 = vld [vmem:[%s1 + $0x28] sm:$0xff]
    %v42 = vld [vmem:[%s1 + $0x30] sm:$0xff]
    %v43 = vld [vmem:[%s1 + $0x38] sm:$0xff]
    %v44 = vld [vmem:[%s1 + $0x40] sm:$0xff]
    %v45 = vld [vmem:[%s1 + $0x48] sm:$0xff]
    %v46 = vld [vmem:[%s1 + $0x50] sm:$0xff]
    %v47 = vld [vmem:[%s1 + $0x58] sm:$0xff]
    %v48 = vld [vmem:[%s1 + $0x60] sm:$0xff]
    %v49 = vld [vmem:[%s1 + $0x68] sm:$0xff]
    %v50 = vld [vmem:[%s1 + $0x70] sm:$0xff]
    %v51 = vld [vmem:[%s1 + $0x78] sm:$0xff]
    %v52 = vld [vmem:[%s2] sm:$0xff]
    %v53 = vld [vmem:[%s2 + $0x8] sm:$0xff]
    %v54 = vld [vmem:[%s2 + $0x10] sm:$0xff]
    %v55 = vld [vmem:[%s2 + $0x18] sm:$0xff]
    %v56 = vld [vmem:[%s2 + $0x20] sm:$0xff]
    %v57 = vld [vmem:[%s2 + $0x28] sm:$0xff]
    %v58 = vld [vmem:[%s2 + $0x30] sm:$0xff]
    %v59 = vld [vmem:[%s2 + $0x38] sm:$0xff]
    %v60 = vld [vmem:[%s2 + $0x40] sm:$0xff]
    %v61 = vld [vmem:[%s2 + $0x48] sm:$0xff]
    %v62 = vld [vmem:[%s2 + $0x50] sm:$0xff]
    %v63 = vld [vmem:[%s2 + $0x58] sm:$0xff]
    %v64 = vld [vmem:[%s2 + $0x60] sm:$0xff]
    %v65 = vld [vmem:[%s2 + $0x68] sm:$0xff]
    %v66 = vld [vmem:[%s2 + $0x70] sm:$0xff]
    %v67 = vld [vmem:[%s2 + $0x78] sm:$0xff]
    %69 = vset.pattern.permute.xlu0 0
    %70 = vperm.xlu0 %69, %v52
    %v71 = vpop.permute.xlu0 %70
    %74 = vset.pattern.permute.xlu0 0
    %75 = vperm.xlu0 %74, %v53
    %v76 = vpop.permute.xlu0 %75
    %79 = vset.pattern.permute.xlu0 0
    %80 = vperm.xlu0 %79, %v54
    %v81 = vpop.permute.xlu0 %80
    %84 = vset.pattern.permute.xlu0 0
    %85 = vperm.xlu0 %84, %v55
    %v86 = vpop.permute.xlu0 %85
    %89 = vset.pattern.permute.xlu0 0
    %90 = vperm.xlu0 %89, %v56
    %v91 = vpop.permute.xlu0 %90
    %94 = vset.pattern.permute.xlu0 0
    %95 = vperm.xlu0 %94, %v57
    %v96 = vpop.permute.xlu0 %95
    %99 = vset.pattern.permute.xlu0 0
    %100 = vperm.xlu0 %99, %v58
    %v101 = vpop.permute.xlu0 %100
    %104 = vset.pattern.permute.xlu0 0
    %105 = vperm.xlu0 %104, %v59
    %v106 = vpop.permute.xlu0 %105
    %109 = vset.pattern.permute.xlu0 0
    %110 = vperm.xlu0 %109, %v60
    %v111 = vpop.permute.xlu0 %110
    %114 = vset.pattern.permute.xlu0 0
    %115 = vperm.xlu0 %114, %v61
    %v116 = vpop.permute.xlu0 %115
    %119 = vset.pattern.permute.xlu0 0
    %120 = vperm.xlu0 %119, %v62
    %v121 = vpop.permute.xlu0 %120
    %124 = vset.pattern.permute.xlu0 0
    %125 = vperm.xlu0 %124, %v63
    %v126 = vpop.permute.xlu0 %125
    %129 = vset.pattern.permute.xlu0 0
    %130 = vperm.xlu0 %129, %v64
    %v131 = vpop.permute.xlu0 %130
    %134 = vset.pattern.permute.xlu0 0
    %135 = vperm.xlu0 %134, %v65
    %v136 = vpop.permute.xlu0 %135
    %139 = vset.pattern.permute.xlu0 0
    %140 = vperm.xlu0 %139, %v66
    %v141 = vpop.permute.xlu0 %140
    %144 = vset.pattern.permute.xlu0 0
    %145 = vperm.xlu0 %144, %v67
    %v146 = vpop.permute.xlu0 %145
    %vm148 = vcmask 64512
    %v150 = vsel %vm148, %v36, 0
    %v153 = vsel %vm148, %v37, 0
    %v156 = vsel %vm148, %v38, 0
    %v159 = vsel %vm148, %v39, 0
    %v162 = vsel %vm148, %v40, 0
    %v165 = vsel %vm148, %v41, 0
    %v168 = vsel %vm148, %v42, 0
    %v171 = vsel %vm148, %v43, 0
    %v174 = vsel %vm148, %v44, 0
    %v177 = vsel %vm148, %v45, 0
    %v180 = vsel %vm148, %v46, 0
    %v183 = vsel %vm148, %v47, 0
    %v186 = vsel %vm148, %v48, 0
    %v189 = vsel %vm148, %v49, 0
    %v192 = vsel %vm148, %v50, 0
    %v195 = vsel %vm148, %v51, 0
    %197 = vmatpush.msra.mxu0 0.0
    %198 = vmatpush.msra.mxu0 0.0
    %199 = vmatpush.msra.mxu0 0.0
    %200 = vmatpush.msra.mxu0 0.0
    %201 = vmatpush.msra.mxu0 0.0
    %202 = vmatpush.msra.mxu0 0.0
    %203 = vmatpush.msra.mxu0 0.0
    %204 = vmatpush.msra.mxu0 0.0
    %205 = vmatpush.msra.mxu0 0.0
    %206 = vmatpush.msra.mxu0 0.0
    %207 = vmatpush.msra.mxu0 0.0
    %208 = vmatpush.msra.mxu0 0.0
    %209 = vmatpush.msra.mxu0 0.0
    %210 = vmatpush.msra.mxu0 0.0
    %211 = vmatpush.msra.mxu0 0.0
    %212 = vmatpush.msra.mxu0 %v35
    %213 = vmatmul.f32.gmra.mxu0 %v150
    %v214 = vpop.f32.mrf.mxu0
    %v215 = vadd.f32 %v71, %v214
    %216 = vmatmul.f32.gmra.mxu0 %v153
    %v217 = vpop.f32.mrf.mxu0
    %v218 = vadd.f32 %v76, %v217
    %219 = vmatmul.f32.gmra.mxu0 %v156
    %v220 = vpop.f32.mrf.mxu0
    %v221 = vadd.f32 %v81, %v220
    %222 = vmatmul.f32.gmra.mxu0 %v159
    %v223 = vpop.f32.mrf.mxu0
    %v224 = vadd.f32 %v86, %v223
    %225 = vmatmul.f32.gmra.mxu0 %v162
    %v226 = vpop.f32.mrf.mxu0
    %v227 = vadd.f32 %v91, %v226
    %228 = vmatmul.f32.gmra.mxu0 %v165
    %v229 = vpop.f32.mrf.mxu0
    %v230 = vadd.f32 %v96, %v229
    %231 = vmatmul.f32.gmra.mxu0 %v168
    %v232 = vpop.f32.mrf.mxu0
    %v233 = vadd.f32 %v101, %v232
    %234 = vmatmul.f32.gmra.mxu0 %v171
    %v235 = vpop.f32.mrf.mxu0
    %v236 = vadd.f32 %v106, %v235
    %237 = vmatmul.f32.gmra.mxu0 %v174
    %v238 = vpop.f32.mrf.mxu0
    %v239 = vadd.f32 %v111, %v238
    %240 = vmatmul.f32.gmra.mxu0 %v177
    %v241 = vpop.f32.mrf.mxu0
    %v242 = vadd.f32 %v116, %v241
    %243 = vmatmul.f32.gmra.mxu0 %v180
    %v244 = vpop.f32.mrf.mxu0
    %v245 = vadd.f32 %v121, %v244
    %246 = vmatmul.f32.gmra.mxu0 %v183
    %v247 = vpop.f32.mrf.mxu0
    %v248 = vadd.f32 %v126, %v247
    %249 = vmatmul.f32.gmra.mxu0 %v186
    %v250 = vpop.f32.mrf.mxu0
    %v251 = vadd.f32 %v131, %v250
    %252 = vmatmul.f32.gmra.mxu0 %v189
    %v253 = vpop.f32.mrf.mxu0
    %v254 = vadd.f32 %v136, %v253
    %255 = vmatmul.f32.gmra.mxu0 %v192
    %v256 = vpop.f32.mrf.mxu0
    %v257 = vadd.f32 %v141, %v256
    %258 = vmatmul.f32.gmra.mxu0 %v195
    %v259 = vpop.f32.mrf.mxu0
    %v260 = vadd.f32 %v146, %v259
    %261 = vdwg.mxu0
    %v262 = vmax.f32 %v215, 0.0
    %v263 = vmax.f32 %v218, 0.0
    %v264 = vmax.f32 %v221, 0.0
    %v265 = vmax.f32 %v224, 0.0
    %v266 = vmax.f32 %v227, 0.0
    %v267 = vmax.f32 %v230, 0.0
    %v268 = vmax.f32 %v233, 0.0
    %v269 = vmax.f32 %v236, 0.0
    %v270 = vmax.f32 %v239, 0.0
    %v271 = vmax.f32 %v242, 0.0
    %v272 = vmax.f32 %v245, 0.0
    %v273 = vmax.f32 %v248, 0.0
    %v274 = vmax.f32 %v251, 0.0
    %v275 = vmax.f32 %v254, 0.0
    %v276 = vmax.f32 %v257, 0.0
    %v277 = vmax.f32 %v260, 0.0
    %v278 = vld [vmem:[%s3] sm:$0xff]
    %v279 = vld [vmem:[%s3 + $0x8] sm:$0xff]
    %v280 = vld [vmem:[%s3 + $0x10] sm:$0xff]
    %v281 = vld [vmem:[%s3 + $0x18] sm:$0xff]
    %v282 = vld [vmem:[%s3 + $0x20] sm:$0xff]
    %v283 = vld [vmem:[%s3 + $0x28] sm:$0xff]
    %v284 = vld [vmem:[%s3 + $0x30] sm:$0xff]
    %v285 = vld [vmem:[%s3 + $0x38] sm:$0xff]
    %v286 = vld [vmem:[%s3 + $0x40] sm:$0xff]
    %v287 = vld [vmem:[%s3 + $0x48] sm:$0xff]
    %v288 = vld [vmem:[%s3 + $0x50] sm:$0xff]
    %v289 = vld [vmem:[%s3 + $0x58] sm:$0xff]
    %v290 = vld [vmem:[%s3 + $0x60] sm:$0xff]
    %v291 = vld [vmem:[%s3 + $0x68] sm:$0xff]
    %v292 = vld [vmem:[%s3 + $0x70] sm:$0xff]
    %v293 = vld [vmem:[%s3 + $0x78] sm:$0xff]
    %v294 = vld [vmem:[%s4] sm:$0xff]
    %v295 = vld [vmem:[%s4 + $0x8] sm:$0xff]
    %v296 = vld [vmem:[%s4 + $0x10] sm:$0xff]
    %v297 = vld [vmem:[%s4 + $0x18] sm:$0xff]
    %v298 = vld [vmem:[%s4 + $0x20] sm:$0xff]
    %v299 = vld [vmem:[%s4 + $0x28] sm:$0xff]
    %v300 = vld [vmem:[%s4 + $0x30] sm:$0xff]
    %v301 = vld [vmem:[%s4 + $0x38] sm:$0xff]
    %v302 = vld [vmem:[%s4 + $0x40] sm:$0xff]
    %v303 = vld [vmem:[%s4 + $0x48] sm:$0xff]
    %v304 = vld [vmem:[%s4 + $0x50] sm:$0xff]
    %v305 = vld [vmem:[%s4 + $0x58] sm:$0xff]
    %v306 = vld [vmem:[%s4 + $0x60] sm:$0xff]
    %v307 = vld [vmem:[%s4 + $0x68] sm:$0xff]
    %v308 = vld [vmem:[%s4 + $0x70] sm:$0xff]
    %v309 = vld [vmem:[%s4 + $0x78] sm:$0xff]
    %311 = vset.pattern.permute.xlu0 0
    %312 = vperm.xlu0 %311, %v294
    %v313 = vpop.permute.xlu0 %312
    %316 = vset.pattern.permute.xlu0 0
    %317 = vperm.xlu0 %316, %v295
    %v318 = vpop.permute.xlu0 %317
    %321 = vset.pattern.permute.xlu0 0
    %322 = vperm.xlu0 %321, %v296
    %v323 = vpop.permute.xlu0 %322
    %326 = vset.pattern.permute.xlu0 0
    %327 = vperm.xlu0 %326, %v297
    %v328 = vpop.permute.xlu0 %327
    %331 = vset.pattern.permute.xlu0 0
    %332 = vperm.xlu0 %331, %v298
    %v333 = vpop.permute.xlu0 %332
    %336 = vset.pattern.permute.xlu0 0
    %337 = vperm.xlu0 %336, %v299
    %v338 = vpop.permute.xlu0 %337
    %341 = vset.pattern.permute.xlu0 0
    %342 = vperm.xlu0 %341, %v300
    %v343 = vpop.permute.xlu0 %342
    %346 = vset.pattern.permute.xlu0 0
    %347 = vperm.xlu0 %346, %v301
    %v348 = vpop.permute.xlu0 %347
    %351 = vset.pattern.permute.xlu0 0
    %352 = vperm.xlu0 %351, %v302
    %v353 = vpop.permute.xlu0 %352
    %356 = vset.pattern.permute.xlu0 0
    %357 = vperm.xlu0 %356, %v303
    %v358 = vpop.permute.xlu0 %357
    %361 = vset.pattern.permute.xlu0 0
    %362 = vperm.xlu0 %361, %v304
    %v363 = vpop.permute.xlu0 %362
    %366 = vset.pattern.permute.xlu0 0
    %367 = vperm.xlu0 %366, %v305
    %v368 = vpop.permute.xlu0 %367
    %371 = vset.pattern.permute.xlu0 0
    %372 = vperm.xlu0 %371, %v306
    %v373 = vpop.permute.xlu0 %372
    %376 = vset.pattern.permute.xlu0 0
    %377 = vperm.xlu0 %376, %v307
    %v378 = vpop.permute.xlu0 %377
    %381 = vset.pattern.permute.xlu0 0
    %382 = vperm.xlu0 %381, %v308
    %v383 = vpop.permute.xlu0 %382
    %386 = vset.pattern.permute.xlu0 0
    %387 = vperm.xlu0 %386, %v309
    %v388 = vpop.permute.xlu0 %387
    %390 = vmatpush.msra.mxu0 %v277
    %391 = vmatpush.msra.mxu0 %v276
    %392 = vmatpush.msra.mxu0 %v275
    %393 = vmatpush.msra.mxu0 %v274
    %394 = vmatpush.msra.mxu0 %v273
    %395 = vmatpush.msra.mxu0 %v272
    %396 = vmatpush.msra.mxu0 %v271
    %397 = vmatpush.msra.mxu0 %v270
    %398 = vmatpush.msra.mxu0 %v269
    %399 = vmatpush.msra.mxu0 %v268
    %400 = vmatpush.msra.mxu0 %v267
    %401 = vmatpush.msra.mxu0 %v266
    %402 = vmatpush.msra.mxu0 %v265
    %403 = vmatpush.msra.mxu0 %v264
    %404 = vmatpush.msra.mxu0 %v263
    %405 = vmatpush.msra.mxu0 %v262
    %406 = vmatmul.f32.gmra.mxu0 %v278
    %v407 = vpop.f32.mrf.mxu0
    %v408 = vadd.f32 %v313, %v407
    %409 = vmatmul.f32.gmra.mxu0 %v279
    %v410 = vpop.f32.mrf.mxu0
    %v411 = vadd.f32 %v318, %v410
    %412 = vmatmul.f32.gmra.mxu0 %v280
    %v413 = vpop.f32.mrf.mxu0
    %v414 = vadd.f32 %v323, %v413
    %415 = vmatmul.f32.gmra.mxu0 %v281
    %v416 = vpop.f32.mrf.mxu0
    %v417 = vadd.f32 %v328, %v416
    %418 = vmatmul.f32.gmra.mxu0 %v282
    %v419 = vpop.f32.mrf.mxu0
    %v420 = vadd.f32 %v333, %v419
    %421 = vmatmul.f32.gmra.mxu0 %v283
    %v422 = vpop.f32.mrf.mxu0
    %v423 = vadd.f32 %v338, %v422
    %424 = vmatmul.f32.gmra.mxu0 %v284
    %v425 = vpop.f32.mrf.mxu0
    %v426 = vadd.f32 %v343, %v425
    %427 = vmatmul.f32.gmra.mxu0 %v285
    %v428 = vpop.f32.mrf.mxu0
    %v429 = vadd.f32 %v348, %v428
    %430 = vmatmul.f32.gmra.mxu0 %v286
    %v431 = vpop.f32.mrf.mxu0
    %v432 = vadd.f32 %v353, %v431
    %433 = vmatmul.f32.gmra.mxu0 %v287
    %v434 = vpop.f32.mrf.mxu0
    %v435 = vadd.f32 %v358, %v434
    %436 = vmatmul.f32.gmra.mxu0 %v288
    %v437 = vpop.f32.mrf.mxu0
    %v438 = vadd.f32 %v363, %v437
    %439 = vmatmul.f32.gmra.mxu0 %v289
    %v440 = vpop.f32.mrf.mxu0
    %v441 = vadd.f32 %v368, %v440
    %442 = vmatmul.f32.gmra.mxu0 %v290
    %v443 = vpop.f32.mrf.mxu0
    %v444 = vadd.f32 %v373, %v443
    %445 = vmatmul.f32.gmra.mxu0 %v291
    %v446 = vpop.f32.mrf.mxu0
    %v447 = vadd.f32 %v378, %v446
    %448 = vmatmul.f32.gmra.mxu0 %v292
    %v449 = vpop.f32.mrf.mxu0
    %v450 = vadd.f32 %v383, %v449
    %451 = vmatmul.f32.gmra.mxu0 %v293
    %v452 = vpop.f32.mrf.mxu0
    %v453 = vadd.f32 %v388, %v452
    %454 = vdwg.mxu0
    %v455 = vmax.f32 %v408, 0.0
    %v456 = vmax.f32 %v411, 0.0
    %v457 = vmax.f32 %v414, 0.0
    %v458 = vmax.f32 %v417, 0.0
    %v459 = vmax.f32 %v420, 0.0
    %v460 = vmax.f32 %v423, 0.0
    %v461 = vmax.f32 %v426, 0.0
    %v462 = vmax.f32 %v429, 0.0
    %v463 = vmax.f32 %v432, 0.0
    %v464 = vmax.f32 %v435, 0.0
    %v465 = vmax.f32 %v438, 0.0
    %v466 = vmax.f32 %v441, 0.0
    %v467 = vmax.f32 %v444, 0.0
    %v468 = vmax.f32 %v447, 0.0
    %v469 = vmax.f32 %v450, 0.0
    %v470 = vmax.f32 %v453, 0.0
    %v471 = vld [vmem:[%s5] sm:$0xff]
    %v472 = vld [vmem:[%s5 + $0x8] sm:$0xff]
    %v473 = vld [vmem:[%s5 + $0x10] sm:$0xff]
    %v474 = vld [vmem:[%s5 + $0x18] sm:$0xff]
    %v475 = vld [vmem:[%s5 + $0x20] sm:$0xff]
    %v476 = vld [vmem:[%s5 + $0x28] sm:$0xff]
    %v477 = vld [vmem:[%s5 + $0x30] sm:$0xff]
    %v478 = vld [vmem:[%s5 + $0x38] sm:$0xff]
    %v479 = vld [vmem:[%s6] sm:$0xff]
    %v480 = vld [vmem:[%s6 + $0x8] sm:$0xff]
    %v481 = vld [vmem:[%s6 + $0x10] sm:$0xff]
    %v482 = vld [vmem:[%s6 + $0x18] sm:$0xff]
    %v483 = vld [vmem:[%s6 + $0x20] sm:$0xff]
    %v484 = vld [vmem:[%s6 + $0x28] sm:$0xff]
    %v485 = vld [vmem:[%s6 + $0x30] sm:$0xff]
    %v486 = vld [vmem:[%s6 + $0x38] sm:$0xff]
    %488 = vset.pattern.permute.xlu0 0
    %489 = vperm.xlu0 %488, %v479
    %v490 = vpop.permute.xlu0 %489
    %493 = vset.pattern.permute.xlu0 0
    %494 = vperm.xlu0 %493, %v480
    %v495 = vpop.permute.xlu0 %494
    %498 = vset.pattern.permute.xlu0 0
    %499 = vperm.xlu0 %498, %v481
    %v500 = vpop.permute.xlu0 %499
    %503 = vset.pattern.permute.xlu0 0
    %504 = vperm.xlu0 %503, %v482
    %v505 = vpop.permute.xlu0 %504
    %508 = vset.pattern.permute.xlu0 0
    %509 = vperm.xlu0 %508, %v483
    %v510 = vpop.permute.xlu0 %509
    %513 = vset.pattern.permute.xlu0 0
    %514 = vperm.xlu0 %513, %v484
    %v515 = vpop.permute.xlu0 %514
    %518 = vset.pattern.permute.xlu0 0
    %519 = vperm.xlu0 %518, %v485
    %v520 = vpop.permute.xlu0 %519
    %523 = vset.pattern.permute.xlu0 0
    %524 = vperm.xlu0 %523, %v486
    %v525 = vpop.permute.xlu0 %524
    %527 = vmatpush.msra.mxu0 %v470
    %528 = vmatpush.msra.mxu0 %v469
    %529 = vmatpush.msra.mxu0 %v468
    %530 = vmatpush.msra.mxu0 %v467
    %531 = vmatpush.msra.mxu0 %v466
    %532 = vmatpush.msra.mxu0 %v465
    %533 = vmatpush.msra.mxu0 %v464
    %534 = vmatpush.msra.mxu0 %v463
    %535 = vmatpush.msra.mxu0 %v462
    %536 = vmatpush.msra.mxu0 %v461
    %537 = vmatpush.msra.mxu0 %v460
    %538 = vmatpush.msra.mxu0 %v459
    %539 = vmatpush.msra.mxu0 %v458
    %540 = vmatpush.msra.mxu0 %v457
    %541 = vmatpush.msra.mxu0 %v456
    %542 = vmatpush.msra.mxu0 %v455
    %543 = vmatmul.f32.gmra.mxu0 %v471
    %v544 = vpop.f32.mrf.mxu0
    %v545 = vadd.f32 %v490, %v544
    %546 = vmatmul.f32.gmra.mxu0 %v472
    %v547 = vpop.f32.mrf.mxu0
    %v548 = vadd.f32 %v495, %v547
    %549 = vmatmul.f32.gmra.mxu0 %v473
    %v550 = vpop.f32.mrf.mxu0
    %v551 = vadd.f32 %v500, %v550
    %552 = vmatmul.f32.gmra.mxu0 %v474
    %v553 = vpop.f32.mrf.mxu0
    %v554 = vadd.f32 %v505, %v553
    %555 = vmatmul.f32.gmra.mxu0 %v475
    %v556 = vpop.f32.mrf.mxu0
    %v557 = vadd.f32 %v510, %v556
    %558 = vmatmul.f32.gmra.mxu0 %v476
    %v559 = vpop.f32.mrf.mxu0
    %v560 = vadd.f32 %v515, %v559
    %561 = vmatmul.f32.gmra.mxu0 %v477
    %v562 = vpop.f32.mrf.mxu0
    %v563 = vadd.f32 %v520, %v562
    %564 = vmatmul.f32.gmra.mxu0 %v478
    %v565 = vpop.f32.mrf.mxu0
    %v566 = vadd.f32 %v525, %v565
    %567 = vdwg.mxu0
    %v568 = vmax.f32 %v545, 0.0
    %v569 = vmax.f32 %v548, 0.0
    %v570 = vmax.f32 %v551, 0.0
    %v571 = vmax.f32 %v554, 0.0
    %v572 = vmax.f32 %v557, 0.0
    %v573 = vmax.f32 %v560, 0.0
    %v574 = vmax.f32 %v563, 0.0
    %v575 = vmax.f32 %v566, 0.0
    %v576 = vld [vmem:[%s7] sm:$0xff]
    %v577 = vld [vmem:[%s7 + $0x8] sm:$0xff]
    %v578 = vld [vmem:[%s7 + $0x10] sm:$0xff]
    %v579 = vld [vmem:[%s7 + $0x18] sm:$0xff]
    %v580 = vld [vmem:[%s7 + $0x20] sm:$0xff]
    %v581 = vld [vmem:[%s7 + $0x28] sm:$0xff]
    %v582 = vld [vmem:[%s7 + $0x30] sm:$0xff]
    %v583 = vld [vmem:[%s7 + $0x38] sm:$0xff]
    %585 = vset.pattern.permute.xlu0 0
    %586 = vperm.xlu0 %585, %v576
    %v587 = vpop.permute.xlu0 %586
    %590 = vset.pattern.permute.xlu0 0
    %591 = vperm.xlu0 %590, %v577
    %v592 = vpop.permute.xlu0 %591
    %595 = vset.pattern.permute.xlu0 0
    %596 = vperm.xlu0 %595, %v578
    %v597 = vpop.permute.xlu0 %596
    %600 = vset.pattern.permute.xlu0 0
    %601 = vperm.xlu0 %600, %v579
    %v602 = vpop.permute.xlu0 %601
    %605 = vset.pattern.permute.xlu0 0
    %606 = vperm.xlu0 %605, %v580
    %v607 = vpop.permute.xlu0 %606
    %610 = vset.pattern.permute.xlu0 0
    %611 = vperm.xlu0 %610, %v581
    %v612 = vpop.permute.xlu0 %611
    %615 = vset.pattern.permute.xlu0 0
    %616 = vperm.xlu0 %615, %v582
    %v617 = vpop.permute.xlu0 %616
    %620 = vset.pattern.permute.xlu0 0
    %621 = vperm.xlu0 %620, %v583
    %v622 = vpop.permute.xlu0 %621
    %v624 = vmul.f32 %v568, %v587
    %v625 = vmul.f32 %v569, %v592
    %v626 = vmul.f32 %v570, %v597
    %v627 = vmul.f32 %v571, %v602
    %v628 = vmul.f32 %v572, %v607
    %v629 = vmul.f32 %v573, %v612
    %v630 = vmul.f32 %v574, %v617
    %v631 = vmul.f32 %v575, %v622
    %v632 = vadd.f32 %v624, %v625
    %v633 = vadd.f32 %v632, %v626
    %v634 = vadd.f32 %v633, %v627
    %v635 = vadd.f32 %v634, %v628
    %v636 = vadd.f32 %v635, %v629
    %v637 = vadd.f32 %v636, %v630
    %v638 = vadd.f32 %v637, %v631
    %v639 = vrot.slane %v638, 4
    %v640 = vadd.f32 %v638, %v639
    %v641 = vrot.slane %v640, 2
    %v642 = vadd.f32 %v640, %v641
    %v643 = vrot.slane %v642, 1
    %v644 = vadd.f32 %v642, %v643
    %v645 = vld [vmem:[#allocation2] sm:$0x1]
    %647 = vset.pattern.permute.xlu0 0
    %648 = vperm.xlu0 %647, %v645
    %v649 = vpop.permute.xlu0 %648
    %v651 = vperm.slane %v649, 0
    %v652 = vadd.f32 %v644, %v651
    %653 = vst [vmem:[#allocation3] sm:$0x1] %v652
    // Predicated region
    $region38: #{tpu_custom_call.1} parent=1 // pred_check
      _
    $region39: #{tpu_custom_call.1} parent=1 // pred_check_branch
      %655 = sbr.rel (0) target = $region41
    $region40: #{tpu_custom_call.1} parent=1 // pred_region
      %657 = vsyncadd [#allocation4], 0
      %s659 = sshll.u32 [#allocation3], 4
      %s660 = int_to_ptr.vmem [resolvable:$true] %s659
      %s661 = sshll.u32 %s9, 4
      %s662 = int_to_ptr.hbm [resolvable:$true] %s661
      %664 = dma.vmem_to_hbm [thread:$0]  %s660, 16, %s662, [#allocation4]
    $region41: #{tpu_custom_call.1} parent=1 // pred_fallthru
      _
    // Predicated region
    $region42: #{tpu_custom_call.1} parent=1 // pred_check
      _
    $region43: #{tpu_custom_call.1} parent=1 // pred_check_branch
      %666 = sbr.rel (0) target = $region45
    $region44: #{tpu_custom_call.1} parent=1 // pred_region
      %668 = dma.done [#allocation4], 16
    $region45: #{tpu_custom_call.1} parent=1 // pred_fallthru
      _
    %669 = vsyncpa [#allocation4], 1

</llo_original>
